<compile_context>
chip_gen: v7x
topology: tpu7x:2x2x1
jax: 0.10.0
libtpu: 0.0.40
codegen_flags: <defaults>
</compile_context>

<pallas_src>
import functools

import jax
import jax.numpy as jnp
from jax import lax
from jax.experimental import pallas as pl
from jax.experimental.pallas import tpu as pltpu

VMEM = pl.BlockSpec(memory_space=pltpu.MemorySpace.VMEM)
NEG_SLOPE = 0.2  # PyG GATConv default LeakyReLU slope
F32 = jnp.float32
BF16 = jnp.bfloat16


def _bf(x):
    return x.astype(BF16)


# --------------------------------------------------------------------------
# Kernels
# --------------------------------------------------------------------------
def gcn_encoder_kernel(adj_ref, x_ref, dinv_ref, w0_ref, b0_ref,
                       wml_ref, bml_ref, out_ref):
    """One GCN encoder per grid step.  Output slab = [N, 2*h2] = mu || logvar."""
    adj_bf = _bf(adj_ref[...])          # [N, N]; 0/1 exact in bf16
    dinv = dinv_ref[...]                # [N, 1] f32 = (deg+1)^{-1/2}
    x_bf = _bf(x_ref[...])

    def layer(inp_bf, w, b):
        y = jnp.dot(inp_bf, _bf(w), preferred_element_type=F32)           # X @ W
        ys = dinv * y                                                      # src scale
        agg = jnp.dot(adj_bf, _bf(ys), preferred_element_type=F32) + ys    # (A+I) @ ys
        return dinv * agg + b                                              # dst scale + bias

    h = jnp.maximum(layer(x_bf, w0_ref[0], b0_ref[0]), 0.0)                # ReLU
    out_ref[0] = layer(_bf(h), wml_ref[0], bml_ref[0])                     # mu || logvar


def _gat_multihead(xw_f32, adst_rows, asrc_rows, mask, num_heads, out_c):
    """Multi-head masked attention aggregation.
    xw_f32:    [N, num_heads*out_c]  per-head transformed features (f32)
    a*_rows:   [num_heads, num_heads*out_c]  block-row attention matrices
    Returns a list of per-head outputs [N, out_c] (f32)."""
    xw_bf = _bf(xw_f32)
    # a_dst . (W x_i)  for all heads -> [N, H] ;  a_src . (W x_j) -> [H, N]
    a_d = lax.dot_general(xw_bf, _bf(adst_rows), (((1,), (1,)), ((), ())),
                          preferred_element_type=F32)
    a_s = lax.dot_general(_bf(asrc_rows), xw_bf, (((1,), (1,)), ((), ())),
                          preferred_element_type=F32)
    non_edge = mask <= 0.0
    outs = []
    for h in range(num_heads):
        e = a_d[:, h:h + 1] + a_s[h:h + 1, :]                  # [N, N]
        e = jnp.where(e > 0, e, NEG_SLOPE * e)                 # LeakyReLU(0.2)
        e = jnp.where(non_edge, jnp.float32(-1e30), e)         # mask non-edges
        m = jnp.max(e, axis=-1, keepdims=True)
        p = jnp.where(non_edge, 0.0, jnp.exp(e - m))
        attn = p * pl.reciprocal(jnp.sum(p, axis=-1, keepdims=True), approx=True)
        xw_h = xw_bf[:, h * out_c:(h + 1) * out_c]             # static slice
        outs.append(jnp.dot(_bf(attn), xw_h, preferred_element_type=F32))
    return outs


def gat_encoder_kernel(mask_ref, x_ref,
                       w1_ref, ad1_ref, as1_ref, b1_ref,
                       wml_ref, adml_ref, asml_ref, bml_ref,
                       out_ref, *, heads, h1, h2):
    """One GAT encoder per grid step.  Output slab = [N, 2*h2] = mu || logvar."""
    mask = mask_ref[...]                                       # adj + I (hoisted)
    x_bf = _bf(x_ref[...])

    # ---- layer 1 (concat=True): one wide matmul for all heads ----
    xw1 = jnp.dot(x_bf, _bf(w1_ref[0]), preferred_element_type=F32)    # [N, heads*h1]
    outs1 = _gat_multihead(xw1, ad1_ref[0], as1_ref[0], mask, heads, h1)
    hfeat = jnp.maximum(jnp.concatenate(outs1, axis=-1) + b1_ref[0], 0.0)

    # ---- mu/logvar GAT layers fused (concat=False -> mean over heads) ----
    xw2 = jnp.dot(_bf(hfeat), _bf(wml_ref[0]), preferred_element_type=F32)  # [N, 2*heads*h2]
    outs2 = _gat_multihead(xw2, adml_ref[0], asml_ref[0], mask, 2 * heads, h2)
    mu = outs2[0]
    for o in outs2[1:heads]:
        mu = mu + o
    lv = outs2[heads]
    for o in outs2[heads + 1:]:
        lv = lv + o
    inv_h = jnp.float32(1.0 / heads)
    out_ref[0] = jnp.concatenate([mu * inv_h, lv * inv_h], axis=-1) + bml_ref[0]


def combine_decode_kernel(ml_ref, eps_ref, adj_rec_ref, mlmax_ref, *, h2):
    """Reparametrize each encoder, take elementwise max across all encoders,
    then InnerProductDecoder.forward_all: sigmoid(Z @ Z^T)."""
    ml = ml_ref[...]                    # [E, N, 2*h2]  (mu || logvar)
    eps = eps_ref[...]                  # [E, N, h2]
    mu = ml[:, :, :h2]
    lv = ml[:, :, h2:]
    # Reference reparametrize: mu + randn * exp(logstd); the module feeds its
    # "logvar" head straight in, so z = mu + eps * exp(lv).
    z = mu + eps * jnp.exp(lv)
    mu_max = jnp.max(mu, axis=0)
    lv_max = jnp.max(lv, axis=0)
    z_max = jnp.max(z, axis=0)
    zb = _bf(z_max)
    logits = lax.dot_general(zb, zb, (((1,), (1,)), ((), ())),
                             preferred_element_type=F32)
    adj_rec_ref[...] = jax.nn.sigmoid(logits)
    mlmax_ref[...] = jnp.concatenate([mu_max, lv_max], axis=-1)


# --------------------------------------------------------------------------
# BlockSpec helpers
# --------------------------------------------------------------------------
def _shared_spec(arr):
    # Same full-array block for every encoder grid step.
    return pl.BlockSpec(arr.shape, lambda e, _nd=arr.ndim: (0,) * _nd)


def _per_encoder_spec(arr):
    # One [1, R, C] slice of a stacked [E, R, C] parameter per grid step.
    return pl.BlockSpec((1,) + arr.shape[1:], lambda e: (e, 0, 0))


# --------------------------------------------------------------------------
# Host-side parameter packing helpers
# --------------------------------------------------------------------------
def _att_row_mat(att):
    """[H, C] attention vectors -> [H, H*C] block-row matrix."""
    H, C = att.shape
    m = jnp.zeros((H, H * C), jnp.float32)
    for h in range(H):
        m = m.at[h, h * C:(h + 1) * C].set(att[h])
    return m


def _block_diag2(a, b):
    r1, c1 = a.shape
    r2, c2 = b.shape
    m = jnp.zeros((r1 + r2, c1 + c2), jnp.float32)
    m = m.at[:r1, :c1].set(a)
    m = m.at[r1:, c1:].set(b)
    return m


# --------------------------------------------------------------------------
# Pallas-call wrappers
# --------------------------------------------------------------------------
def run_gcn_encoders(adj, x, dinv, gcn_params):
    n = x.shape[0]
    w0 = jnp.stack([p["w0"] for p in gcn_params])                      # [E, Fin, h1]
    b0 = jnp.stack([p["b0"] for p in gcn_params])                      # [E, 1, h1]
    wml = jnp.stack([jnp.concatenate([p["wmu"], p["wlv"]], -1) for p in gcn_params])
    bml = jnp.stack([jnp.concatenate([p["bmu"], p["blv"]], -1) for p in gcn_params])
    num_e = w0.shape[0]
    d2x2 = wml.shape[-1]
    return pl.pallas_call(
        gcn_encoder_kernel,
        out_shape=jax.ShapeDtypeStruct((num_e, n, d2x2), jnp.float32),
        grid=(num_e,),
        in_specs=[_shared_spec(adj), _shared_spec(x), _shared_spec(dinv),
                  _per_encoder_spec(w0), _per_encoder_spec(b0),
                  _per_encoder_spec(wml), _per_encoder_spec(bml)],
        out_specs=pl.BlockSpec((1, n, d2x2), lambda e: (e, 0, 0)),
        compiler_params=pltpu.CompilerParams(dimension_semantics=("parallel",)),
    )(adj, x, dinv, w0, b0, wml, bml)


def run_gat_encoders(mask, x, gat_params, heads, h1, h2):
    n = x.shape[0]
    w1 = jnp.stack([p["w1"] for p in gat_params])                      # [E, Fin, heads*h1]
    ad1 = jnp.stack([_att_row_mat(p["ad1"]) for p in gat_params])      # [E, heads, heads*h1]
    as1 = jnp.stack([_att_row_mat(p["as1"]) for p in gat_params])
    b1 = jnp.stack([p["b1"] for p in gat_params])                      # [E, 1, heads*h1]
    wml = jnp.stack([jnp.concatenate([p["wmu"], p["wlv"]], -1) for p in gat_params])
    adml = jnp.stack([_block_diag2(_att_row_mat(p["admu"]), _att_row_mat(p["adlv"]))
                      for p in gat_params])                            # [E, 2*heads, 2*heads*h2]
    asml = jnp.stack([_block_diag2(_att_row_mat(p["asmu"]), _att_row_mat(p["aslv"]))
                      for p in gat_params])
    bml = jnp.stack([jnp.concatenate([p["bmu"], p["blv"]], -1) for p in gat_params])
    num_e = w1.shape[0]
    kern = functools.partial(gat_encoder_kernel, heads=heads, h1=h1, h2=h2)
    return pl.pallas_call(
        kern,
        out_shape=jax.ShapeDtypeStruct((num_e, n, 2 * h2), jnp.float32),
        grid=(num_e,),
        in_specs=[_shared_spec(mask), _shared_spec(x),
                  _per_encoder_spec(w1), _per_encoder_spec(ad1),
                  _per_encoder_spec(as1), _per_encoder_spec(b1),
                  _per_encoder_spec(wml), _per_encoder_spec(adml),
                  _per_encoder_spec(asml), _per_encoder_spec(bml)],
        out_specs=pl.BlockSpec((1, n, 2 * h2), lambda e: (e, 0, 0)),
        compiler_params=pltpu.CompilerParams(dimension_semantics=("parallel",)),
    )(mask, x, w1, ad1, as1, b1, wml, adml, asml, bml)


def combine_and_decode(ml_all, eps_all, h2):
    n = ml_all.shape[1]
    kern = functools.partial(combine_decode_kernel, h2=h2)
    return pl.pallas_call(
        kern,
        out_shape=(jax.ShapeDtypeStruct((n, n), jnp.float32),
                   jax.ShapeDtypeStruct((n, 2 * h2), jnp.float32)),
        in_specs=[VMEM, VMEM],
        out_specs=(VMEM, VMEM),
    )(ml_all, eps_all)


def multi_head_vgae_forward(x, adj, params, eps_key, heads, h1, h2):
    n = x.shape[0]
    # Hoisted, shared across ALL encoders (computed once):
    dinv = lax.rsqrt(jnp.sum(adj, axis=-1, keepdims=True) + 1.0)   # D^{-1/2} of (A+I)
    mask = adj + jnp.eye(n, dtype=adj.dtype)                        # self-looped mask

    gcn_params = [p for a, p in params if a == "gcn"]
    gat_params = [p for a, p in params if a != "gcn"]

    slabs = []
    if gcn_params:
        slabs.append(run_gcn_encoders(adj, x, dinv, gcn_params))
    if gat_params:
        slabs.append(run_gat_encoders(mask, x, gat_params, heads, h1, h2))
    ml_all = slabs[0] if len(slabs) == 1 else jnp.concatenate(slabs, axis=0)

    # torch.randn_like-style per-encoder reparametrization noise.
    # TODO(synk): generate eps in-kernel (pltpu.prng_seed + pltpu.stateful_normal)
    # to drop the [E, N, h2] HBM array when scaling up.
    eps_all = jax.random.normal(eps_key, (ml_all.shape[0], n, h2), dtype=jnp.float32)

    adj_rec, ml_max = combine_and_decode(ml_all, eps_all, h2)
    return adj_rec, ml_max[:, :h2], ml_max[:, h2:]


# --------------------------------------------------------------------------
# Deterministic parameter init (shapes follow the PyTorch module's __init__)
# --------------------------------------------------------------------------
def init_params(key, arch_list, fin, h1, h2, heads):
    def nrm(k, shape, scale=0.1):
        return scale * jax.random.normal(k, shape, dtype=jnp.float32)

    params = []
    for arch in arch_list:
        key, sub = jax.random.split(key)
        ks = jax.random.split(sub, 12)
        if arch == "gcn":
            p = dict(
                w0=nrm(ks[0], (fin, h1)), b0=jnp.zeros((1, h1), jnp.float32),
                wmu=nrm(ks[1], (h1, h2)), bmu=jnp.zeros((1, h2), jnp.float32),
                wlv=nrm(ks[2], (h1, h2)), blv=jnp.zeros((1, h2), jnp.float32),
            )
        else:
            p = dict(
                w1=nrm(ks[0], (fin, heads * h1)),
                as1=nrm(ks[1], (heads, h1)), ad1=nrm(ks[2], (heads, h1)),
                b1=jnp.zeros((1, heads * h1), jnp.float32),
                wmu=nrm(ks[3], (heads * h1, heads * h2)),
                asmu=nrm(ks[4], (heads, h2)), admu=nrm(ks[5], (heads, h2)),
                bmu=jnp.zeros((1, h2), jnp.float32),
                wlv=nrm(ks[6], (heads * h1, heads * h2)),
                aslv=nrm(ks[7], (heads, h2)), adlv=nrm(ks[8], (heads, h2)),
                blv=jnp.zeros((1, h2), jnp.float32),
            )
        params.append((arch, p))
    return params


# --------------------------------------------------------------------------
if __name__ == "__main__":
    key = jax.random.PRNGKey(0)
    k_adj, k_x, k_param, k_eps = jax.random.split(key, 4)

    n, fin, h1, h2, heads = 16, 8, 16, 8, 3
    arch_list = ["gcn", "gat", "gcn", "gat"]

    # Dense symmetric adjacency (no self-loops; pipeline adds them).
    upper = jnp.triu(jax.random.bernoulli(k_adj, 0.3, (n, n)).astype(jnp.float32), k=1)
    adj = upper + upper.T
    x = jax.random.normal(k_x, (n, fin), dtype=jnp.float32)

    params = init_params(k_param, arch_list, fin, h1, h2, heads)

    adj_rec, mu_max, logvar_max = multi_head_vgae_forward(
        x, adj, params, k_eps, heads, h1, h2)
    jax.block_until_ready((adj_rec, mu_max, logvar_max))

    assert adj_rec.shape == (n, n)
    assert mu_max.shape == (n, h2)
    assert logvar_max.shape == (n, h2)
    assert bool(jnp.all(jnp.isfinite(adj_rec)))
    print("KERNEL_OK")
</pallas_src>

<mosaic_0001>
module attributes {stable_mosaic.version = 11 : i64} {
  func.func @gcn_encoder_kernel(%arg0: i32, %arg1: memref<16x16xf32, #tpu.memory_space<vmem>>, %arg2: memref<16x8xf32, #tpu.memory_space<vmem>>, %arg3: memref<16x1xf32, #tpu.memory_space<vmem>>, %arg4: memref<1x8x16xf32, #tpu.memory_space<vmem>>, %arg5: memref<1x1x16xf32, #tpu.memory_space<vmem>>, %arg6: memref<1x16x16xf32, #tpu.memory_space<vmem>>, %arg7: memref<1x1x16xf32, #tpu.memory_space<vmem>>, %arg8: memref<1x16x16xf32, #tpu.memory_space<vmem>>) attributes {dimension_semantics = [#tpu.dimension_semantics<parallel>], iteration_bounds = array<i64: 2>, scalar_prefetch = 0 : i64, scratch_operands = 0 : i64, tpu.core_type = #tpu.core_type<tc>, window_params = [{pipeline_mode = #tpu.pipeline_mode<synchronous>, transform_indices = @transform_0, window_bounds = array<i64: 16, 16>}, {pipeline_mode = #tpu.pipeline_mode<synchronous>, transform_indices = @transform_1, window_bounds = array<i64: 16, 8>}, {pipeline_mode = #tpu.pipeline_mode<synchronous>, transform_indices = @transform_2, window_bounds = array<i64: 16, 1>}, {transform_indices = @transform_3, window_bounds = array<i64: 1, 8, 16>}, {transform_indices = @transform_4, window_bounds = array<i64: 1, 1, 16>}, {transform_indices = @transform_5, window_bounds = array<i64: 1, 16, 16>}, {transform_indices = @transform_6, window_bounds = array<i64: 1, 1, 16>}, {transform_indices = @transform_7, window_bounds = array<i64: 1, 16, 16>}]} {
    %c0 = arith.constant 0 : index
    %c0_0 = arith.constant 0 : index
    %0 = vector.load %arg1[%c0, %c0_0] : memref<16x16xf32, #tpu.memory_space<vmem>>, vector<16x16xf32>
    %1 = arith.truncf %0 : vector<16x16xf32> to vector<16x16xbf16>
    %c0_1 = arith.constant 0 : index
    %c0_2 = arith.constant 0 : index
    %2 = vector.load %arg3[%c0_1, %c0_2] : memref<16x1xf32, #tpu.memory_space<vmem>>, vector<16x1xf32>
    %c0_3 = arith.constant 0 : index
    %c0_4 = arith.constant 0 : index
    %3 = vector.load %arg2[%c0_3, %c0_4] : memref<16x8xf32, #tpu.memory_space<vmem>>, vector<16x8xf32>
    %4 = arith.truncf %3 : vector<16x8xf32> to vector<16x8xbf16>
    %c0_5 = arith.constant 0 : index
    %c0_6 = arith.constant 0 : index
    %c0_7 = arith.constant 0 : index
    %5 = vector.load %arg4[%c0_5, %c0_6, %c0_7] : memref<1x8x16xf32, #tpu.memory_space<vmem>>, vector<1x8x16xf32>
    %6 = vector.shape_cast %5 : vector<1x8x16xf32> to vector<8x16xf32>
    %c0_8 = arith.constant 0 : index
    %c0_9 = arith.constant 0 : index
    %c0_10 = arith.constant 0 : index
    %7 = vector.load %arg5[%c0_8, %c0_9, %c0_10] : memref<1x1x16xf32, #tpu.memory_space<vmem>>, vector<1x1x16xf32>
    %8 = vector.shape_cast %7 : vector<1x1x16xf32> to vector<1x16xf32>
    %9 = arith.truncf %6 : vector<8x16xf32> to vector<8x16xbf16>
    %cst = arith.constant dense<0.000000e+00> : vector<16x16xf32>
    %10 = tpu.matmul %4, %9, %cst {dimension_numbers = #tpu.dot_dimension_numbers<[1], [0], [0], [1], [0, 0, 1, 1], [], []>} : vector<16x8xbf16>, vector<8x16xbf16>, vector<16x16xf32> -> vector<16x16xf32>
    %11 = vector.broadcast %2 : vector<16x1xf32> to vector<16x16xf32>
    %12 = arith.mulf %11, %10 : vector<16x16xf32>
    %13 = arith.truncf %12 : vector<16x16xf32> to vector<16x16xbf16>
    %cst_11 = arith.constant dense<0.000000e+00> : vector<16x16xf32>
    %14 = tpu.matmul %1, %13, %cst_11 {dimension_numbers = #tpu.dot_dimension_numbers<[1], [0], [0], [1], [0, 0, 1, 1], [], []>} : vector<16x16xbf16>, vector<16x16xbf16>, vector<16x16xf32> -> vector<16x16xf32>
    %15 = arith.addf %14, %12 : vector<16x16xf32>
    %16 = vector.broadcast %2 : vector<16x1xf32> to vector<16x16xf32>
    %17 = arith.mulf %16, %15 : vector<16x16xf32>
    %18 = vector.broadcast %8 : vector<1x16xf32> to vector<16x16xf32>
    %19 = arith.addf %17, %18 : vector<16x16xf32>
    %cst_12 = arith.constant 0.000000e+00 : f32
    %20 = vector.broadcast %cst_12 : f32 to vector<16x16xf32>
    %21 = arith.maximumf %19, %20 : vector<16x16xf32>
    %22 = arith.truncf %21 : vector<16x16xf32> to vector<16x16xbf16>
    %c0_13 = arith.constant 0 : index
    %c0_14 = arith.constant 0 : index
    %c0_15 = arith.constant 0 : index
    %23 = vector.load %arg6[%c0_13, %c0_14, %c0_15] : memref<1x16x16xf32, #tpu.memory_space<vmem>>, vector<1x16x16xf32>
    %24 = vector.shape_cast %23 : vector<1x16x16xf32> to vector<16x16xf32>
    %c0_16 = arith.constant 0 : index
    %c0_17 = arith.constant 0 : index
    %c0_18 = arith.constant 0 : index
    %25 = vector.load %arg7[%c0_16, %c0_17, %c0_18] : memref<1x1x16xf32, #tpu.memory_space<vmem>>, vector<1x1x16xf32>
    %26 = vector.shape_cast %25 : vector<1x1x16xf32> to vector<1x16xf32>
    %27 = arith.truncf %24 : vector<16x16xf32> to vector<16x16xbf16>
    %cst_19 = arith.constant dense<0.000000e+00> : vector<16x16xf32>
    %28 = tpu.matmul %22, %27, %cst_19 {dimension_numbers = #tpu.dot_dimension_numbers<[1], [0], [0], [1], [0, 0, 1, 1], [], []>} : vector<16x16xbf16>, vector<16x16xbf16>, vector<16x16xf32> -> vector<16x16xf32>
    %29 = vector.broadcast %2 : vector<16x1xf32> to vector<16x16xf32>
    %30 = arith.mulf %29, %28 : vector<16x16xf32>
    %31 = arith.truncf %30 : vector<16x16xf32> to vector<16x16xbf16>
    %cst_20 = arith.constant dense<0.000000e+00> : vector<16x16xf32>
    %32 = tpu.matmul %1, %31, %cst_20 {dimension_numbers = #tpu.dot_dimension_numbers<[1], [0], [0], [1], [0, 0, 1, 1], [], []>} : vector<16x16xbf16>, vector<16x16xbf16>, vector<16x16xf32> -> vector<16x16xf32>
    %33 = arith.addf %32, %30 : vector<16x16xf32>
    %34 = vector.broadcast %2 : vector<16x1xf32> to vector<16x16xf32>
    %35 = arith.mulf %34, %33 : vector<16x16xf32>
    %36 = vector.broadcast %26 : vector<1x16xf32> to vector<16x16xf32>
    %37 = arith.addf %35, %36 : vector<16x16xf32>
    %c0_21 = arith.constant 0 : index
    %c0_22 = arith.constant 0 : index
    %c0_23 = arith.constant 0 : index
    %38 = vector.load %arg8[%c0_21, %c0_22, %c0_23] : memref<1x16x16xf32, #tpu.memory_space<vmem>>, vector<1x16x16xf32>
    %39 = vector.shape_cast %38 : vector<1x16x16xf32> to vector<16x16xf32>
    %40 = vector.shape_cast %37 : vector<16x16xf32> to vector<1x16x16xf32>
    tpu.vector_store %arg8[%c0_21, %c0_22, %c0_23], %40 {strides = array<i32>} : memref<1x16x16xf32, #tpu.memory_space<vmem>>, vector<1x16x16xf32>,
    return
  }
  func.func @transform_0(%arg0: i32) -> (i32, i32) {
    %c0_i32 = arith.constant 0 : i32
    %c0_i32_0 = arith.constant 0 : i32
    %c0_i32_1 = arith.constant 0 : i32
    return %c0_i32, %c0_i32_0 : i32, i32
  }
  func.func @transform_1(%arg0: i32) -> (i32, i32) {
    %c0_i32 = arith.constant 0 : i32
    %c0_i32_0 = arith.constant 0 : i32
    %c0_i32_1 = arith.constant 0 : i32
    return %c0_i32, %c0_i32_0 : i32, i32
  }
  func.func @transform_2(%arg0: i32) -> (i32, i32) {
    %c0_i32 = arith.constant 0 : i32
    %c0_i32_0 = arith.constant 0 : i32
    %c0_i32_1 = arith.constant 0 : i32
    return %c0_i32, %c0_i32_0 : i32, i32
  }
  func.func @transform_3(%arg0: i32) -> (i32, i32, i32) {
    %c0_i32 = arith.constant 0 : i32
    %c0_i32_0 = arith.constant 0 : i32
    %c0_i32_1 = arith.constant 0 : i32
    return %arg0, %c0_i32, %c0_i32_0 : i32, i32, i32
  }
  func.func @transform_4(%arg0: i32) -> (i32, i32, i32) {
    %c0_i32 = arith.constant 0 : i32
    %c0_i32_0 = arith.constant 0 : i32
    %c0_i32_1 = arith.constant 0 : i32
    return %arg0, %c0_i32, %c0_i32_0 : i32, i32, i32
  }
  func.func @transform_5(%arg0: i32) -> (i32, i32, i32) {
    %c0_i32 = arith.constant 0 : i32
    %c0_i32_0 = arith.constant 0 : i32
    %c0_i32_1 = arith.constant 0 : i32
    return %arg0, %c0_i32, %c0_i32_0 : i32, i32, i32
  }
  func.func @transform_6(%arg0: i32) -> (i32, i32, i32) {
    %c0_i32 = arith.constant 0 : i32
    %c0_i32_0 = arith.constant 0 : i32
    %c0_i32_1 = arith.constant 0 : i32
    return %arg0, %c0_i32, %c0_i32_0 : i32, i32, i32
  }
  func.func @transform_7(%arg0: i32) -> (i32, i32, i32) {
    %c0_i32 = arith.constant 0 : i32
    %c0_i32_0 = arith.constant 0 : i32
    %c0_i32_1 = arith.constant 0 : i32
    return %arg0, %c0_i32, %c0_i32_0 : i32, i32, i32
  }
}

</mosaic_0001>

<llo_original>
// kernel: tpu_custom_call.1
$region0: #{tpu_custom_call.1}
  #allocation0 [shape = 'u32[]', space=smem, size = 0x4, offset = 0x4, fixed_abs, tag = 'smem constant byte address 0x4 - core index']
  #allocation1 [shape = 'u32[144,128]{1,0:T(1,128)}', space=vmem, size = 0x12000, scoped, tag = 'internal scratch']
  %s0 = inlined_call_operand.vmem [shape: f32[16,16], index: 0, kind: input, shape index: {}]
  %s1 = inlined_call_operand.vmem [shape: f32[16,8], index: 1, kind: input, shape index: {}]
  %s2 = inlined_call_operand.vmem [shape: f32[16,1], index: 2, kind: input, shape index: {}]
  %s3 = inlined_call_operand.hbm [shape: f32[2,8,16], index: 3, kind: input, shape index: {}]
  %s4 = inlined_call_operand.vmem [shape: f32[2,1,16], index: 4, kind: input, shape index: {}]
  %s5 = inlined_call_operand.vmem [shape: f32[2,16,16], index: 5, kind: input, shape index: {}]
  %s6 = inlined_call_operand.vmem [shape: f32[2,1,16], index: 6, kind: input, shape index: {}]
  %s7 = inlined_call_operand.hbm [shape: f32[2,16,16], index: 7, kind: output, shape index: {}]
  %s8 = sld [smem:[#allocation0]]
  $region65: #{tpu_custom_call.1} parent=0
    _
  %s10 = ssub.s32 1, %s8
  %s11 = scalar_select 0, %s10, %s8
  $region1: #{tpu_custom_call.1} parent=0
    #allocation2 [shape = 'u8[8192]{0}', space=vmem, size = 0x2000, scoped, tag = 'input window, operand 3']
    #allocation3 [shape = 's32[2]{0}', space=sflag, size = 0x8, scoped, tag = 'scoped memory for tpu_custom_call.1']
    #allocation4 [shape = 's32[2]{0}', space=sflag, size = 0x8, scoped, tag = 'scoped memory for tpu_custom_call.1']
    #allocation5 [shape = 'u8[16384]{0}', space=vmem, size = 0x4000, scoped, tag = 'output window, operand 0']
    %12 = vsyncpa [#allocation3], 0
    %s13 = scalar_lea.sflag [#allocation3], 1
    %14 = vsyncpa %s13, 0
    %15 = vsyncpa [#allocation4], 0
    %s16 = scalar_lea.sflag [#allocation4], 1
    %17 = vsyncpa %s16, 0
    loop: start=0, step=1, limit=4
    $region2: #{tpu_custom_call.1} parent=1 // loop_pre_header
      _
    $region3: #{tpu_custom_call.1} parent=1 // loop_header
      %s19 = sphi 0, %s23
      %p20 = scmp.ge.s32.totalorder %s19, 4
      %s27 = sphi 0, %s27
      %s29 = sphi 0, %s27
      %s30 = sphi 0, %s29
      %s44 = sphi 0, %s30
      %s48 = sphi 0, %s48
      %s50 = sphi 0, %s48
      %s51 = sphi 0, %s50
      %s65 = sphi 0, %s51
      %s69 = sphi 0, %s69
      %s71 = sphi 0, %s69
      %s72 = sphi 0, %s71
      %s86 = sphi 0, %s72
      %s92 = sphi 0, %s94
      %s95 = sphi 0, %s92
      %s96 = sphi 0, %s95
      %s112 = sphi 0, %s96
      %s118 = sphi 0, %s120
      %s121 = sphi 0, %s118
      %s122 = sphi 0, %s121
      %s138 = sphi 0, %s122
      %s144 = sphi 0, %s146
      %s147 = sphi 0, %s144
      %s148 = sphi 0, %s147
      %s164 = sphi 0, %s148
      %s170 = sphi 0, %s172
      %s173 = sphi 0, %s170
      %s174 = sphi 0, %s173
      %s190 = sphi 0, %s174
      %s196 = sphi 0, %s198
      %s199 = sphi 0, %s196
      %s200 = sphi 0, %s199
      %s216 = sphi 0, %s200
    $region4: #{tpu_custom_call.1} parent=1 // loop_header_branch
      %22 = sbr.rel (%p20) target = $region8
    $region5: #{tpu_custom_call.1} parent=1 // loop_body
      %s24 = ssub.s32 %s19, 1
      %s25 = ssub.s32 %s19, 2
      %s26 = sadd.s32 %s19, 1
      %s28 = sadd.s32 %s27, 1
      %p31 = scmp.eq.s32.totalorder %s19, 1
      %p32 = scmp.ne.s32.totalorder %s27, %s29
      %p33 = scmp.eq.s32.totalorder %s19, 0
      %p34 = por %p32, %p33
      %p35 = scmp.ne.s32.totalorder %s27, %s29
      %p36 = scmp.eq.s32.totalorder %s24, 1
      %p37 = por %p35, %p36
      %p38 = scmp.ne.s32.totalorder %s29, %s30
      %p39 = scmp.eq.s32.totalorder %s24, 0
      %p40 = por %p38, %p39
      %p41 = scmp.ne.s32.totalorder %s29, %s30
      %p42 = scmp.eq.s32.totalorder %s25, 1
      %p43 = por %p41, %p42
      %p45 = scmp.ne.s32.totalorder %s30, %s44
      %p46 = scmp.eq.s32.totalorder %s25, 0
      %p47 = por %p45, %p46
      %s49 = sadd.s32 %s48, 1
      %p52 = scmp.eq.s32.totalorder %s19, 1
      %p53 = scmp.ne.s32.totalorder %s48, %s50
      %p54 = scmp.eq.s32.totalorder %s19, 0
      %p55 = por %p53, %p54
      %p56 = scmp.ne.s32.totalorder %s48, %s50
      %p57 = scmp.eq.s32.totalorder %s24, 1
      %p58 = por %p56, %p57
      %p59 = scmp.ne.s32.totalorder %s50, %s51
      %p60 = scmp.eq.s32.totalorder %s24, 0
      %p61 = por %p59, %p60
      %p62 = scmp.ne.s32.totalorder %s50, %s51
      %p63 = scmp.eq.s32.totalorder %s25, 1
      %p64 = por %p62, %p63
      %p66 = scmp.ne.s32.totalorder %s51, %s65
      %p67 = scmp.eq.s32.totalorder %s25, 0
      %p68 = por %p66, %p67
      %s70 = sadd.s32 %s69, 1
      %p73 = scmp.eq.s32.totalorder %s19, 1
      %p74 = scmp.ne.s32.totalorder %s69, %s71
      %p75 = scmp.eq.s32.totalorder %s19, 0
      %p76 = por %p74, %p75
      %p77 = scmp.ne.s32.totalorder %s69, %s71
      %p78 = scmp.eq.s32.totalorder %s24, 1
      %p79 = por %p77, %p78
      %p80 = scmp.ne.s32.totalorder %s71, %s72
      %p81 = scmp.eq.s32.totalorder %s24, 0
      %p82 = por %p80, %p81
      %p83 = scmp.ne.s32.totalorder %s71, %s72
      %p84 = scmp.eq.s32.totalorder %s25, 1
      %p85 = por %p83, %p84
      %p87 = scmp.ne.s32.totalorder %s72, %s86
      %p88 = scmp.eq.s32.totalorder %s25, 0
      %p89 = por %p87, %p88
      %s90 = ssub.s32 %s19, %s26
      %p91 = scmp.eq.s32.totalorder %s90, 0
      %s93 = sadd.s32 %s92, 1
      %s94 = scalar_select %p91, %s92, %s93
      %p97 = pneg %p91
      %p98 = scmp.eq.s32.totalorder %s19, 1
      %p99 = por %p97, %p98
      %p100 = scmp.ne.s32.totalorder %s92, %s95
      %p101 = scmp.eq.s32.totalorder %s19, 0
      %p102 = por %p100, %p101
      %p103 = scmp.ne.s32.totalorder %s92, %s95
      %p104 = scmp.eq.s32.totalorder %s24, 1
      %p105 = por %p103, %p104
      %p106 = scmp.ne.s32.totalorder %s95, %s96
      %p107 = scmp.eq.s32.totalorder %s24, 0
      %p108 = por %p106, %p107
      %p109 = scmp.ne.s32.totalorder %s95, %s96
      %p110 = scmp.eq.s32.totalorder %s25, 1
      %p111 = por %p109, %p110
      %p113 = scmp.ne.s32.totalorder %s96, %s112
      %p114 = scmp.eq.s32.totalorder %s25, 0
      %p115 = por %p113, %p114
      %s116 = ssub.s32 %s19, %s26
      %p117 = scmp.eq.s32.totalorder %s116, 0
      %s119 = sadd.s32 %s118, 1
      %s120 = scalar_select %p117, %s118, %s119
      %p123 = pneg %p117
      %p124 = scmp.eq.s32.totalorder %s19, 1
      %p125 = por %p123, %p124
      %p126 = scmp.ne.s32.totalorder %s118, %s121
      %p127 = scmp.eq.s32.totalorder %s19, 0
      %p128 = por %p126, %p127
      %p129 = scmp.ne.s32.totalorder %s118, %s121
      %p130 = scmp.eq.s32.totalorder %s24, 1
      %p131 = por %p129, %p130
      %p132 = scmp.ne.s32.totalorder %s121, %s122
      %p133 = scmp.eq.s32.totalorder %s24, 0
      %p134 = por %p132, %p133
      %p135 = scmp.ne.s32.totalorder %s121, %s122
      %p136 = scmp.eq.s32.totalorder %s25, 1
      %p137 = por %p135, %p136
      %p139 = scmp.ne.s32.totalorder %s122, %s138
      %p140 = scmp.eq.s32.totalorder %s25, 0
      %p141 = por %p139, %p140
      %s142 = ssub.s32 %s19, %s26
      %p143 = scmp.eq.s32.totalorder %s142, 0
      %s145 = sadd.s32 %s144, 1
      %s146 = scalar_select %p143, %s144, %s145
      %p149 = pneg %p143
      %p150 = scmp.eq.s32.totalorder %s19, 1
      %p151 = por %p149, %p150
      %p152 = scmp.ne.s32.totalorder %s144, %s147
      %p153 = scmp.eq.s32.totalorder %s19, 0
      %p154 = por %p152, %p153
      %p155 = scmp.ne.s32.totalorder %s144, %s147
      %p156 = scmp.eq.s32.totalorder %s24, 1
      %p157 = por %p155, %p156
      %p158 = scmp.ne.s32.totalorder %s147, %s148
      %p159 = scmp.eq.s32.totalorder %s24, 0
      %p160 = por %p158, %p159
      %p161 = scmp.ne.s32.totalorder %s147, %s148
      %p162 = scmp.eq.s32.totalorder %s25, 1
      %p163 = por %p161, %p162
      %p165 = scmp.ne.s32.totalorder %s148, %s164
      %p166 = scmp.eq.s32.totalorder %s25, 0
      %p167 = por %p165, %p166
      %s168 = ssub.s32 %s19, %s26
      %p169 = scmp.eq.s32.totalorder %s168, 0
      %s171 = sadd.s32 %s170, 1
      %s172 = scalar_select %p169, %s170, %s171
      %p175 = pneg %p169
      %p176 = scmp.eq.s32.totalorder %s19, 1
      %p177 = por %p175, %p176
      %p178 = scmp.ne.s32.totalorder %s170, %s173
      %p179 = scmp.eq.s32.totalorder %s19, 0
      %p180 = por %p178, %p179
      %p181 = scmp.ne.s32.totalorder %s170, %s173
      %p182 = scmp.eq.s32.totalorder %s24, 1
      %p183 = por %p181, %p182
      %p184 = scmp.ne.s32.totalorder %s173, %s174
      %p185 = scmp.eq.s32.totalorder %s24, 0
      %p186 = por %p184, %p185
      %p187 = scmp.ne.s32.totalorder %s173, %s174
      %p188 = scmp.eq.s32.totalorder %s25, 1
      %p189 = por %p187, %p188
      %p191 = scmp.ne.s32.totalorder %s174, %s190
      %p192 = scmp.eq.s32.totalorder %s25, 0
      %p193 = por %p191, %p192
      %s194 = ssub.s32 %s19, %s26
      %p195 = scmp.eq.s32.totalorder %s194, 0
      %s197 = sadd.s32 %s196, 1
      %s198 = scalar_select %p195, %s196, %s197
      %p201 = pneg %p195
      %p202 = scmp.eq.s32.totalorder %s19, 1
      %p203 = por %p201, %p202
      %p204 = scmp.ne.s32.totalorder %s196, %s199
      %p205 = scmp.eq.s32.totalorder %s19, 0
      %p206 = por %p204, %p205
      %p207 = scmp.ne.s32.totalorder %s196, %s199
      %p208 = scmp.eq.s32.totalorder %s24, 1
      %p209 = por %p207, %p208
      %p210 = scmp.ne.s32.totalorder %s199, %s200
      %p211 = scmp.eq.s32.totalorder %s24, 0
      %p212 = por %p210, %p211
      %p213 = scmp.ne.s32.totalorder %s199, %s200
      %p214 = scmp.eq.s32.totalorder %s25, 1
      %p215 = por %p213, %p214
      %p217 = scmp.ne.s32.totalorder %s200, %s216
      %p218 = scmp.eq.s32.totalorder %s25, 0
      %p219 = por %p217, %p218
      %p220 = scmp.le.s32.totalorder 1, %s19
      %p221 = scmp.lt.s32.totalorder %s19, 3
      %p222 = pnand %p220, %p221
      %p223 = pneg %p222
      // Predicated region
      $region9: #{tpu_custom_call.1} parent=5 // pred_check
        _
      $region10: #{tpu_custom_call.1} parent=5 // pred_check_branch
        %225 = sbr.rel (%p222) target = $region12
      $region11: #{tpu_custom_call.1} parent=5 // pred_region
        %s226 = ssub.s32 %s19, 1
        // Predicated region
        $region13: #{tpu_custom_call.1} parent=11 // pred_check
          %p227 = pneg %p40
        $region14: #{tpu_custom_call.1} parent=11 // pred_check_branch
          %229 = sbr.rel (%p227) target = $region16
        $region15: #{tpu_custom_call.1} parent=11 // pred_region
          _
        $region16: #{tpu_custom_call.1} parent=11 // pred_fallthru
          _
        // Predicated region
        $region17: #{tpu_custom_call.1} parent=11 // pred_check
          %p230 = pneg %p61
        $region18: #{tpu_custom_call.1} parent=11 // pred_check_branch
          %232 = sbr.rel (%p230) target = $region20
        $region19: #{tpu_custom_call.1} parent=11 // pred_region
          _
        $region20: #{tpu_custom_call.1} parent=11 // pred_fallthru
          _
        // Predicated region
        $region21: #{tpu_custom_call.1} parent=11 // pred_check
          %p233 = pneg %p82
        $region22: #{tpu_custom_call.1} parent=11 // pred_check_branch
          %235 = sbr.rel (%p233) target = $region24
        $region23: #{tpu_custom_call.1} parent=11 // pred_region
          _
        $region24: #{tpu_custom_call.1} parent=11 // pred_fallthru
          _
      $region12: #{tpu_custom_call.1} parent=5 // pred_fallthru
        _
      %p236 = scmp.lt.s32.totalorder %s19, 2
      // Predicated region
      $region25: #{tpu_custom_call.1} parent=5 // pred_check
        %p237 = pneg %p236
      $region26: #{tpu_custom_call.1} parent=5 // pred_check_branch
        %239 = sbr.rel (%p237) target = $region28
      $region27: #{tpu_custom_call.1} parent=5 // pred_region
        // Predicated region
        $region29: #{tpu_custom_call.1} parent=27 // pred_check
          %p240 = pneg %p102
        $region30: #{tpu_custom_call.1} parent=27 // pred_check_branch
          %242 = sbr.rel (%p240) target = $region32
        $region31: #{tpu_custom_call.1} parent=27 // pred_region
          %s243 = sand.u32 %s92, 1
          %s244 = scalar_lea.sflag [#allocation3], %s243
          %s245 = sand.u32 %s92, 1
          %s246 = smul.addr %s245, 8
          %s247 = scalar_lea.vmem [#allocation2], %s246
          %s249 = ssub.s32 128, 128
          %250 = vsyncadd %s244, %s249
          %s251 = smul.addr %s19, 128
          %s252 = scalar_lea.hbm %s3, %s251
          %s254 = sshll.u32 %s247, 4
          %s255 = int_to_ptr.vmem [resolvable:$true] %s254
          %257 = dma.hbm_to_vmem [thread:$0]  %s252, 128, %s255, %s244
        $region32: #{tpu_custom_call.1} parent=27 // pred_fallthru
          _
        // Predicated region
        $region33: #{tpu_custom_call.1} parent=27 // pred_check
          %p258 = pneg %p128
        $region34: #{tpu_custom_call.1} parent=27 // pred_check_branch
          %260 = sbr.rel (%p258) target = $region36
        $region35: #{tpu_custom_call.1} parent=27 // pred_region
          %p261 = scmp.lt.s32.totalorder %s19, 1
          %s262 = scalar_select %p261, %s19, 1
          %s263 = scalar_lea.vmem %s4, %s262
        $region36: #{tpu_custom_call.1} parent=27 // pred_fallthru
          _
        // Predicated region
        $region37: #{tpu_custom_call.1} parent=27 // pred_check
          %p264 = pneg %p154
        $region38: #{tpu_custom_call.1} parent=27 // pred_check_branch
          %266 = sbr.rel (%p264) target = $region40
        $region39: #{tpu_custom_call.1} parent=27 // pred_region
          %p267 = scmp.lt.s32.totalorder %s19, 1
          %s268 = scalar_select %p267, %s19, 1
          %s269 = smul.addr %s268, 2
          %s270 = smul.addr %s269, 8
          %s271 = scalar_lea.vmem %s5, %s270
        $region40: #{tpu_custom_call.1} parent=27 // pred_fallthru
          _
        // Predicated region
        $region41: #{tpu_custom_call.1} parent=27 // pred_check
          %p272 = pneg %p180
        $region42: #{tpu_custom_call.1} parent=27 // pred_check_branch
          %274 = sbr.rel (%p272) target = $region44
        $region43: #{tpu_custom_call.1} parent=27 // pred_region
          %p275 = scmp.lt.s32.totalorder %s19, 1
          %s276 = scalar_select %p275, %s19, 1
          %s277 = scalar_lea.vmem %s6, %s276
        $region44: #{tpu_custom_call.1} parent=27 // pred_fallthru
          _
      $region28: #{tpu_custom_call.1} parent=5 // pred_fallthru
        _
      %p278 = scmp.le.s32.totalorder 1, %s19
      %p279 = scmp.lt.s32.totalorder %s19, 3
      %p280 = pnand %p278, %p279
      %p281 = pneg %p280
      // Predicated region
      $region45: #{tpu_custom_call.1} parent=5 // pred_check
        _
      $region46: #{tpu_custom_call.1} parent=5 // pred_check_branch
        %283 = sbr.rel (%p280) target = $region48
      $region47: #{tpu_custom_call.1} parent=5 // pred_region
        %s284 = ssub.s32 %s19, 1
        %s285 = sand.u32 %s95, 1
        %s286 = scalar_lea.sflag [#allocation3], %s285
        %s287 = sand.u32 %s95, 1
        %s288 = smul.addr %s287, 8
        %s289 = scalar_lea.vmem [#allocation2], %s288
        // Predicated region
        $region49: #{tpu_custom_call.1} parent=47 // pred_check
          %p290 = pneg %p108
        $region50: #{tpu_custom_call.1} parent=47 // pred_check_branch
          %292 = sbr.rel (%p290) target = $region52
        $region51: #{tpu_custom_call.1} parent=47 // pred_region
          %293 = dma.done %s286, 128
        $region52: #{tpu_custom_call.1} parent=47 // pred_fallthru
          _
        %p294 = pneg %p40
        %p295 = pneg %p37
        %p296 = pneg %p61
        %p297 = pneg %p58
        %p298 = pneg %p82
        %p299 = pneg %p79
        %s300 = sand.u32 %s95, 1
        %s301 = scalar_lea.sflag [#allocation3], %s300
        %s302 = sand.u32 %s95, 1
        %s303 = smul.addr %s302, 8
        %s304 = scalar_lea.vmem [#allocation2], %s303
        %p305 = pneg %p108
        %p306 = pneg %p105
        %p307 = scmp.lt.s32.totalorder %s24, 1
        %s308 = scalar_select %p307, %s24, 1
        %s309 = scalar_lea.vmem %s4, %s308
        %p310 = pneg %p134
        %p311 = pneg %p131
        %p312 = scmp.lt.s32.totalorder %s24, 1
        %s313 = scalar_select %p312, %s24, 1
        %s314 = smul.addr %s313, 2
        %s315 = smul.addr %s314, 8
        %s316 = scalar_lea.vmem %s5, %s315
        %p317 = pneg %p160
        %p318 = pneg %p157
        %p319 = scmp.lt.s32.totalorder %s24, 1
        %s320 = scalar_select %p319, %s24, 1
        %s321 = scalar_lea.vmem %s6, %s320
        %p322 = pneg %p186
        %p323 = pneg %p183
        %p324 = pneg %p212
        %p325 = pneg %p209
        %s326 = sand.u32 %s199, 1
        %s327 = scalar_lea.sflag [#allocation4], %s326
        %s328 = sand.u32 %s199, 1
        %s329 = smul.addr %s328, 16
        %s330 = scalar_lea.vmem [#allocation5], %s329
        %p331 = scmp.lt.s32.totalorder %s24, 1
        %s332 = scalar_select %p331, %s24, 1
        %s333 = scalar_lea.vmem %s4, %s332
        %p334 = scmp.lt.s32.totalorder %s24, 1
        %s335 = scalar_select %p334, %s24, 1
        %s336 = smul.addr %s335, 2
        %s337 = smul.addr %s336, 8
        %s338 = scalar_lea.vmem %s5, %s337
        %p339 = scmp.lt.s32.totalorder %s24, 1
        %s340 = scalar_select %p339, %s24, 1
        %s341 = scalar_lea.vmem %s6, %s340
        %v343 = vld [vmem:[%s0] sm:$0xff]
        %v344 = vld [vmem:[%s0 + $0x8] sm:$0xff]
        %v345 = vpack.c.bf16 %v344, %v343
        %v346 = vld [vmem:[%s2] sm:$0xff]
        %v347 = vld [vmem:[%s2 + $0x8] sm:$0xff]
        %v348 = vld [vmem:[%s1] sm:$0xff]
        %v349 = vld [vmem:[%s1 + $0x8] sm:$0xff]
        %v350 = vpack.c.bf16 %v349, %v348
        %v351 = vld [vmem:[%s289] sm:$0xff]
        %v352 = vld [vmem:[%s333] sm:$0x1]
        %v353 = vpack.c.bf16 %v351, %v351
        %vm354 = vcmask 64512
        %v356 = vsel %vm354, %v350, 0
        %vm358 = vcmask 1043456
        %v360 = vsel %vm358, %v353, 0
        %362 = vmatprep.subr.bf16.mxu0 0
        %363 = vmatpush1.bf16.msra.mxu0 %v360
        %364 = vmatprep.subr.bf16.mxu0 0
        %365 = vmatpush1.bf16.msra.mxu0 0
        %366 = vmatprep.subr.bf16.mxu0 0
        %367 = vmatpush1.bf16.msra.mxu0 0
        %368 = vmatprep.subr.bf16.mxu0 0
        %369 = vmatpush1.bf16.msra.mxu0 0
        %370 = vmatprep.subr.bf16.mxu0 0
        %371 = vmatpush1.bf16.msra.mxu0 0
        %372 = vmatprep.subr.bf16.mxu0 0
        %373 = vmatpush1.bf16.msra.mxu0 0
        %374 = vmatprep.subr.bf16.mxu0 0
        %375 = vmatpush1.bf16.msra.mxu0 0
        %376 = vmatprep.subr.bf16.mxu0 0
        %377 = vmatpush1.bf16.msra.mxu0 0
        %378 = vmatprep.subr.bf16.mxu0 0
        %379 = vmatpush1.bf16.msra.mxu0 0
        %380 = vmatprep.subr.bf16.mxu0 0
        %381 = vmatpush1.bf16.msra.mxu0 0
        %382 = vmatprep.subr.bf16.mxu0 0
        %383 = vmatpush1.bf16.msra.mxu0 0
        %384 = vmatprep.subr.bf16.mxu0 0
        %385 = vmatpush1.bf16.msra.mxu0 0
        %386 = vmatprep.subr.bf16.mxu0 0
        %387 = vmatpush1.bf16.msra.mxu0 0
        %388 = vmatprep.subr.bf16.mxu0 0
        %389 = vmatpush1.bf16.msra.mxu0 0
        %390 = vmatprep.subr.bf16.mxu0 0
        %391 = vmatpush1.bf16.msra.mxu0 0
        %392 = vmatprep.subr.bf16.mxu0 0
        %393 = vmatpush1.bf16.msra.mxu0 0
        %394 = vmatprep.mubr.bf16.mxu0 0
        %395 = vmatmul.mubr.bf16.gmra.mrb[0].mxu0 %v356
        %v396 = vpop.f32.mrb[0].mxu0
        %v397 = vadd.f32 0.0, %v396
        %v398 = vpop.f32.mrb[0].mxu0
        %v399 = vpop.f32.mrb[0].mxu0
        %v400 = vadd.f32 0.0, %v399
        %v401 = vpop.f32.mrb[0].mxu0
        %402 = vdwg.mxu0
        %404 = vset.pattern.permute.xlu0 0
        %405 = vperm.xlu0 %404, %v346
        %v406 = vpop.permute.xlu0 %405
        %409 = vset.pattern.permute.xlu0 0
        %410 = vperm.xlu0 %409, %v347
        %v411 = vpop.permute.xlu0 %410
        %v413 = vmul.f32 %v406, %v397
        %v414 = vmul.f32 %v411, %v400
        %v415 = vpack.c.bf16 %v414, %v413
        %vm416 = vcmask 130048
        %v418 = vsel %vm416, %v345, 0
        %420 = vmatprep.subr.bf16.mxu0 0
        %421 = vmatpush1.bf16.msra.mxu0 %v415
        %422 = vmatprep.subr.bf16.mxu0 0
        %423 = vmatpush1.bf16.msra.mxu0 0
        %424 = vmatprep.subr.bf16.mxu0 0
        %425 = vmatpush1.bf16.msra.mxu0 0
        %426 = vmatprep.subr.bf16.mxu0 0
        %427 = vmatpush1.bf16.msra.mxu0 0
        %428 = vmatprep.subr.bf16.mxu0 0
        %429 = vmatpush1.bf16.msra.mxu0 0
        %430 = vmatprep.subr.bf16.mxu0 0
        %431 = vmatpush1.bf16.msra.mxu0 0
        %432 = vmatprep.subr.bf16.mxu0 0
        %433 = vmatpush1.bf16.msra.mxu0 0
        %434 = vmatprep.subr.bf16.mxu0 0
        %435 = vmatpush1.bf16.msra.mxu0 0
        %436 = vmatprep.subr.bf16.mxu0 0
        %437 = vmatpush1.bf16.msra.mxu0 0
        %438 = vmatprep.subr.bf16.mxu0 0
        %439 = vmatpush1.bf16.msra.mxu0 0
        %440 = vmatprep.subr.bf16.mxu0 0
        %441 = vmatpush1.bf16.msra.mxu0 0
        %442 = vmatprep.subr.bf16.mxu0 0
        %443 = vmatpush1.bf16.msra.mxu0 0
        %444 = vmatprep.subr.bf16.mxu0 0
        %445 = vmatpush1.bf16.msra.mxu0 0
        %446 = vmatprep.subr.bf16.mxu0 0
        %447 = vmatpush1.bf16.msra.mxu0 0
        %448 = vmatprep.subr.bf16.mxu0 0
        %449 = vmatpush1.bf16.msra.mxu0 0
        %450 = vmatprep.subr.bf16.mxu0 0
        %451 = vmatpush1.bf16.msra.mxu0 0
        %452 = vmatprep.mubr.bf16.mxu0 0
        %453 = vmatmul.mubr.bf16.gmra.mrb[0].mxu0 %v418
        %v454 = vpop.f32.mrb[0].mxu0
        %v455 = vadd.f32 %v413, %v454
        %v456 = vpop.f32.mrb[0].mxu0
        %v457 = vpop.f32.mrb[0].mxu0
        %v458 = vadd.f32 %v414, %v457
        %v459 = vpop.f32.mrb[0].mxu0
        %460 = vdwg.mxu0
        %v461 = vmul.f32 %v406, %v455
        %v462 = vmul.f32 %v411, %v458
        %v464 = vlaneseq
        %v465 = vshrl.u32 %v464, 7
        %v466 = vsub.s32 0, %v465
        %v467 = vrot.slane %v352, %v466
        %v469 = vadd.f32 %v461, %v467
        %v470 = vadd.f32 %v462, %v467
        %v471 = vmax.f32 %v469, 0.0
        %v472 = vmax.f32 %v470, 0.0
        %v473 = vpack.c.bf16 %v472, %v471
        %v474 = vld [vmem:[%s338] sm:$0xff]
        %v475 = vld [vmem:[%s338 + $0x8] sm:$0xff]
        %v476 = vld [vmem:[%s341] sm:$0x1]
        %v477 = vpack.c.bf16 %v475, %v474
        %v479 = vsel %vm416, %v473, 0
        %481 = vmatprep.subr.bf16.mxu0 0
        %482 = vmatpush1.bf16.msra.mxu0 %v477
        %483 = vmatprep.subr.bf16.mxu0 0
        %484 = vmatpush1.bf16.msra.mxu0 0
        %485 = vmatprep.subr.bf16.mxu0 0
        %486 = vmatpush1.bf16.msra.mxu0 0
        %487 = vmatprep.subr.bf16.mxu0 0
        %488 = vmatpush1.bf16.msra.mxu0 0
        %489 = vmatprep.subr.bf16.mxu0 0
        %490 = vmatpush1.bf16.msra.mxu0 0
        %491 = vmatprep.subr.bf16.mxu0 0
        %492 = vmatpush1.bf16.msra.mxu0 0
        %493 = vmatprep.subr.bf16.mxu0 0
        %494 = vmatpush1.bf16.msra.mxu0 0
        %495 = vmatprep.subr.bf16.mxu0 0
        %496 = vmatpush1.bf16.msra.mxu0 0
        %497 = vmatprep.subr.bf16.mxu0 0
        %498 = vmatpush1.bf16.msra.mxu0 0
        %499 = vmatprep.subr.bf16.mxu0 0
        %500 = vmatpush1.bf16.msra.mxu0 0
        %501 = vmatprep.subr.bf16.mxu0 0
        %502 = vmatpush1.bf16.msra.mxu0 0
        %503 = vmatprep.subr.bf16.mxu0 0
        %504 = vmatpush1.bf16.msra.mxu0 0
        %505 = vmatprep.subr.bf16.mxu0 0
        %506 = vmatpush1.bf16.msra.mxu0 0
        %507 = vmatprep.subr.bf16.mxu0 0
        %508 = vmatpush1.bf16.msra.mxu0 0
        %509 = vmatprep.subr.bf16.mxu0 0
        %510 = vmatpush1.bf16.msra.mxu0 0
        %511 = vmatprep.subr.bf16.mxu0 0
        %512 = vmatpush1.bf16.msra.mxu0 0
        %513 = vmatprep.mubr.bf16.mxu0 0
        %514 = vmatmul.mubr.bf16.gmra.mrb[0].mxu0 %v479
        %v515 = vpop.f32.mrb[0].mxu0
        %v516 = vadd.f32 0.0, %v515
        %v517 = vpop.f32.mrb[0].mxu0
        %v518 = vpop.f32.mrb[0].mxu0
        %v519 = vadd.f32 0.0, %v518
        %v520 = vpop.f32.mrb[0].mxu0
        %521 = vdwg.mxu0
        %v522 = vmul.f32 %v406, %v516
        %v523 = vmul.f32 %v411, %v519
        %v524 = vpack.c.bf16 %v523, %v522
        %525 = vmatprep.subr.bf16.mxu0 0
        %526 = vmatpush1.bf16.msra.mxu0 %v524
        %527 = vmatprep.subr.bf16.mxu0 0
        %528 = vmatpush1.bf16.msra.mxu0 0
        %529 = vmatprep.subr.bf16.mxu0 0
        %530 = vmatpush1.bf16.msra.mxu0 0
        %531 = vmatprep.subr.bf16.mxu0 0
        %532 = vmatpush1.bf16.msra.mxu0 0
        %533 = vmatprep.subr.bf16.mxu0 0
        %534 = vmatpush1.bf16.msra.mxu0 0
        %535 = vmatprep.subr.bf16.mxu0 0
        %536 = vmatpush1.bf16.msra.mxu0 0
        %537 = vmatprep.subr.bf16.mxu0 0
        %538 = vmatpush1.bf16.msra.mxu0 0
        %539 = vmatprep.subr.bf16.mxu0 0
        %540 = vmatpush1.bf16.msra.mxu0 0
        %541 = vmatprep.subr.bf16.mxu0 0
        %542 = vmatpush1.bf16.msra.mxu0 0
        %543 = vmatprep.subr.bf16.mxu0 0
        %544 = vmatpush1.bf16.msra.mxu0 0
        %545 = vmatprep.subr.bf16.mxu0 0
        %546 = vmatpush1.bf16.msra.mxu0 0
        %547 = vmatprep.subr.bf16.mxu0 0
        %548 = vmatpush1.bf16.msra.mxu0 0
        %549 = vmatprep.subr.bf16.mxu0 0
        %550 = vmatpush1.bf16.msra.mxu0 0
        %551 = vmatprep.subr.bf16.mxu0 0
        %552 = vmatpush1.bf16.msra.mxu0 0
        %553 = vmatprep.subr.bf16.mxu0 0
        %554 = vmatpush1.bf16.msra.mxu0 0
        %555 = vmatprep.subr.bf16.mxu0 0
        %556 = vmatpush1.bf16.msra.mxu0 0
        %557 = vmatprep.mubr.bf16.mxu0 0
        %558 = vmatmul.mubr.bf16.gmra.mrb[0].mxu0 %v418
        %v559 = vpop.f32.mrb[0].mxu0
        %v560 = vadd.f32 %v522, %v559
        %v561 = vpop.f32.mrb[0].mxu0
        %v562 = vpop.f32.mrb[0].mxu0
        %v563 = vadd.f32 %v523, %v562
        %v564 = vpop.f32.mrb[0].mxu0
        %565 = vdwg.mxu0
        %v566 = vmul.f32 %v406, %v560
        %v567 = vmul.f32 %v411, %v563
        %v569 = vlaneseq
        %v570 = vshrl.u32 %v569, 7
        %v571 = vsub.s32 0, %v570
        %v572 = vrot.slane %v476, %v571
        %v574 = vadd.f32 %v566, %v572
        %v575 = vadd.f32 %v567, %v572
        %576 = vst.msk [vmem:[%s330] sm:$0xff] %vm416, %v574
        %577 = vst.msk [vmem:[%s330 + $0x8] sm:$0xff] %vm416, %v575
        %s578 = sand.u32 %s199, 1
        %s579 = scalar_lea.sflag [#allocation4], %s578
        %s580 = sand.u32 %s199, 1
        %s581 = smul.addr %s580, 16
        %s582 = scalar_lea.vmem [#allocation5], %s581
        // Predicated region
        $region53: #{tpu_custom_call.1} parent=47 // pred_check
          %p583 = pneg %p209
        $region54: #{tpu_custom_call.1} parent=47 // pred_check_branch
          %585 = sbr.rel (%p583) target = $region56
        $region55: #{tpu_custom_call.1} parent=47 // pred_region
          %s587 = ssub.s32 256, 256
          %588 = vsyncadd %s579, %s587
          %s589 = smul.addr %s24, 2
          %s590 = smul.addr %s589, 128
          %s591 = scalar_lea.hbm %s7, %s590
          %s592 = sshll.u32 %s582, 4
          %s593 = int_to_ptr.vmem [resolvable:$true] %s592
          %598 = dma.vmem_to_hbm [thread:$0]  %s593, 256, %s591, %s579, 128, 128, 8
        $region56: #{tpu_custom_call.1} parent=47 // pred_fallthru
          _
      $region48: #{tpu_custom_call.1} parent=5 // pred_fallthru
        _
      %p599 = scmp.le.s32.totalorder 2, %s19
      // Predicated region
      $region57: #{tpu_custom_call.1} parent=5 // pred_check
        %p600 = pneg %p599
      $region58: #{tpu_custom_call.1} parent=5 // pred_check_branch
        %602 = sbr.rel (%p600) target = $region60
      $region59: #{tpu_custom_call.1} parent=5 // pred_region
        %s603 = ssub.s32 %s19, 2
        // Predicated region
        $region61: #{tpu_custom_call.1} parent=59 // pred_check
          %p604 = pneg %p215
        $region62: #{tpu_custom_call.1} parent=59 // pred_check_branch
          %606 = sbr.rel (%p604) target = $region64
        $region63: #{tpu_custom_call.1} parent=59 // pred_region
          %s607 = sand.u32 %s200, 1
          %s608 = scalar_lea.sflag [#allocation4], %s607
          %s609 = sand.u32 %s200, 1
          %s610 = smul.addr %s609, 16
          %s611 = scalar_lea.vmem [#allocation5], %s610
          %612 = dma.done %s608, 256
        $region64: #{tpu_custom_call.1} parent=59 // pred_fallthru
          _
      $region60: #{tpu_custom_call.1} parent=5 // pred_fallthru
        _
    $region6: #{tpu_custom_call.1} parent=1 // loop_footer
      %s23 = sadd.s32 1, %s19
    $region7: #{tpu_custom_call.1} parent=1 // loop_footer_branch
      %18 = sbr.rel target = $region3
    $region8: #{tpu_custom_call.1} parent=1 // loop_exit
      _
    %613 = vsyncpa [#allocation3], 1
    %s614 = scalar_lea.sflag [#allocation3], 1
    %615 = vsyncpa %s614, 1
    %616 = vsyncpa [#allocation4], 1
    %s617 = scalar_lea.sflag [#allocation4], 1
    %618 = vsyncpa %s617, 1

</llo_original>
